<compile_context>
chip_gen: v7x
topology: tpu7x:2x2x1
jax: 0.10.0
libtpu: 0.0.40
codegen_flags: <defaults>
</compile_context>

<pallas_src>
import math
import functools
import numpy as np
import jax
import jax.numpy as jnp
from jax.experimental import pallas as pl
from jax.experimental.pallas import tpu as pltpu

MAX_TM = 512                     # row tile: big enough to hit the DMA roofline
VMEM_LIMIT = 48 * 1024 * 1024    # safe on v5e/v6e (128 MiB) and v7x (64 MiB physical)


def _round_up(x, m):
    return ((x + m - 1) // m) * m


def _tile_rows(m, max_tm=MAX_TM):
    """Pick a row tile that (a) avoids any host-side pad copy when possible, (b) is large
    enough to amortize per-grid-step overhead, and (c) leaves >=2 grid steps so both v7x
    TensorCores get work whenever there is enough of it.  Returns (tm, padded_rows)."""
    if m > max_tm:
        for tm in (max_tm, 256, 128, 64, 32, 16, 8):
            if m % tm == 0:
                return tm, m
        return max_tm, _round_up(m, max_tm)        # rare fallback: pad rows once
    if m >= 256 and m % 16 == 0:
        return m // 2, m                           # 2 tiles -> both TCs busy on v7x
    return m, m                                    # tiny level: single full-row tile


# ---------------------------------------------------------------------------
# Pallas kernels
# ---------------------------------------------------------------------------
def _matmul_bias_kernel(x_ref, w_ref, b_ref, o_ref, *, act):
    """o = x @ w + b (bf16 inputs, f32 accumulate), optional fused SiLU (EUP exp + recip)."""
    y = jnp.dot(x_ref[...], w_ref[...], preferred_element_type=jnp.float32) + b_ref[...]
    if act:
        y = y * pl.reciprocal(1.0 + jnp.exp(-y), approx=True)     # SiLU
    o_ref[...] = y.astype(o_ref.dtype)


def _predict_decode_kernel(x_ref, w_ref, b_ref, c_ref, o_ref, *, stride, W, H, C):
    """Fused predictor 1x1 conv + sigmoid + YOLO decode, fully vectorized over lanes.

    Input lane layout  (per anchor block of width L=C+5): [tx, ty, tw, th, obj, cls...]
    Output lane layout (per anchor block of width L     ): [x1, y1, x2, y2, obj, obj*cls...]
    Pad lanes (>= A*L) are written as zeros; the wrapper slices them off.
    """
    tm = x_ref.shape[0]
    y = jnp.dot(x_ref[...], w_ref[...], preferred_element_type=jnp.float32) + b_ref[...]
    p = pl.reciprocal(1.0 + jnp.exp(-y), approx=True)              # sigmoid, (tm, 128)

    c = c_ref[...]                                                 # (8, 128) lane constants
    xsel, ysel = c[0:1], c[1:2]                                    # x / y center lanes
    whsel, objsel, clssel, anch = c[2:3], c[3:4], c[4:5], c[5:6]   # wh / obj / cls lanes, anchor wh
    xysel = xsel + ysel

    # grid coordinates generated in-kernel: global row -> (gx, gy)
    r = pl.program_id(0) * tm + jax.lax.broadcasted_iota(jnp.int32, (tm, 1), 0)
    gx = (r % W).astype(jnp.float32)
    gy = ((r // W) % H).astype(jnp.float32)
    g = gx * xsel + gy * ysel                                      # (tm, 128)

    cxy = (2.0 * p - 0.5 + g) * stride                             # cx/cy at xy lanes
    half = (2.0 * p * p) * anch                                    # w/2, h/2 at wh lanes
    lanes = p.shape[1]
    half_at_xy = pltpu.roll(half, shift=lanes - 2, axis=1)         # shift -2: wh half -> xy lane
    cxy_at_wh = pltpu.roll(cxy, shift=2, axis=1)                   # cx/cy -> wh lane

    box_lo = cxy - half_at_xy                                      # x1 / y1 (valid at xy lanes)
    box_hi = cxy_at_wh + half                                      # x2 / y2 (valid at wh lanes)

    # broadcast obj onto its C class lanes with C cheap XLU rolls
    obj_only = p * objsel
    spread = jnp.zeros_like(p)
    for k in range(1, C + 1):
        spread = spread + pltpu.roll(obj_only, shift=k, axis=1)

    o_ref[...] = (xysel * box_lo + whsel * box_hi + objsel * p
                  + clssel * (spread * p)).astype(o_ref.dtype)


# ---------------------------------------------------------------------------
# Kernel wrappers
# ---------------------------------------------------------------------------
def conv1x1(x_nhwc, w, b, act=False):
    """1x1 conv as a tiled Pallas matmul.  x: (N,H,W,Cin), w: (Cin,Cout) bf16, b: (Cout,) f32."""
    N, H, W, Cin = x_nhwc.shape
    Kc, Cout = w.shape
    assert Kc == Cin
    M = N * H * W
    xf = x_nhwc.reshape(M, Cin).astype(jnp.bfloat16)
    tm, Mp = _tile_rows(M)
    if Mp != M:
        xf = jnp.pad(xf, ((0, Mp - M), (0, 0)))
    out = pl.pallas_call(
        functools.partial(_matmul_bias_kernel, act=act),
        out_shape=jax.ShapeDtypeStruct((Mp, Cout), jnp.bfloat16),
        grid=(Mp // tm,),
        in_specs=[
            pl.BlockSpec((tm, Cin), lambda i: (i, 0)),
            pl.BlockSpec((Cin, Cout), lambda i: (0, 0)),
            pl.BlockSpec((1, Cout), lambda i: (0, 0)),
        ],
        out_specs=pl.BlockSpec((tm, Cout), lambda i: (i, 0)),
        compiler_params=pltpu.CompilerParams(
            dimension_semantics=("parallel",),
            vmem_limit_bytes=VMEM_LIMIT),
    )(xf, w, b.reshape(1, Cout))
    return out[:M].reshape(N, H, W, Cout)


def _decode_lane_consts(A, L, anchors_wh, lanes):
    """Per-lane constant pack (8, lanes) f32 for the vectorized decode."""
    lane = np.arange(lanes)
    off = lane % L
    a_idx = np.minimum(lane // L, A - 1)
    valid = lane < A * L
    aw = np.asarray(anchors_wh, np.float32)                        # (A, 2)
    pack = np.zeros((8, lanes), np.float32)
    pack[0] = ((off == 0) & valid)                                 # x-center lanes
    pack[1] = ((off == 1) & valid)                                 # y-center lanes
    pack[2] = (((off == 2) | (off == 3)) & valid)                  # wh lanes
    pack[3] = ((off == 4) & valid)                                 # obj lanes
    pack[4] = ((off >= 5) & valid)                                 # cls lanes
    pack[5] = np.where((off == 2) & valid, aw[a_idx, 0],
                       np.where((off == 3) & valid, aw[a_idx, 1], 0.0))   # anchor w/h
    return pack.astype(np.float32)


def predict_decode_level(feat, w, b, anchors_wh, stride, num_classes, num_anchors):
    """Fused predictor conv + decode for one pyramid level.  feat: (N,H,W,Cin) bf16."""
    N, H, W, Cin = feat.shape
    A, C = num_anchors, num_classes
    L = C + 5
    COUT = w.shape[1]                                              # lane-padded (128)
    M = N * H * W
    xf = feat.reshape(M, Cin).astype(jnp.bfloat16)
    tm, Mp = _tile_rows(M)
    if Mp != M:
        xf = jnp.pad(xf, ((0, Mp - M), (0, 0)))
    consts = jnp.asarray(_decode_lane_consts(A, L, anchors_wh, COUT))

    out = pl.pallas_call(
        functools.partial(_predict_decode_kernel, stride=float(stride), W=W, H=H, C=C),
        out_shape=jax.ShapeDtypeStruct((Mp, COUT), jnp.float32),
        grid=(Mp // tm,),
        in_specs=[
            pl.BlockSpec((tm, Cin), lambda i: (i, 0)),
            pl.BlockSpec((Cin, COUT), lambda i: (0, 0)),
            pl.BlockSpec((1, COUT), lambda i: (0, 0)),
            pl.BlockSpec((8, COUT), lambda i: (0, 0)),
        ],
        out_specs=pl.BlockSpec((tm, COUT), lambda i: (i, 0)),
        compiler_params=pltpu.CompilerParams(
            dimension_semantics=("parallel",),
            vmem_limit_bytes=VMEM_LIMIT),
    )(xf, w, b.reshape(1, COUT), consts)

    out = out[:M, :A * L].reshape(N, H, W, A, L)
    box = out[..., 0:4]                                            # xyxy
    obj = out[..., 4]
    cls = out[..., 5:]                                             # already obj * cls
    return obj, box, cls


# ---------------------------------------------------------------------------
# Model pieces (glue in plain JAX / numpy)
# ---------------------------------------------------------------------------
def space_to_depth(x, r):
    # TODO(synk): could be folded into the conv1x1 index_map ((r,r,C) patch reads) to save
    # one HBM round-trip per stage; kept as an XLA reshape/transpose for clarity.
    N, H, W, C = x.shape
    x = x.reshape(N, H // r, r, W // r, r, C)
    x = x.transpose(0, 1, 3, 2, 4, 5).reshape(N, H // r, W // r, r * r * C)
    return x


def transformer_forward(images, min_size, max_size, stride):
    """Resize each (C,H,W) image to fit (min_size,max_size), batch directly into NHWC."""
    transformed = []
    for img in images:
        c, h, w = img.shape
        sf = min(min_size / min(h, w), max_size / max(h, w))
        img_hwc = jnp.transpose(img, (1, 2, 0))                    # tiny per-image transpose
        if sf != 1:
            nh, nw = round(h * sf), round(w * sf)
            img_hwc = jax.image.resize(img_hwc, (nh, nw, c), method='bilinear', antialias=False)
        transformed.append((img_hwc, sf))
    image_shapes = [(int(im.shape[0]), int(im.shape[1])) for im, _ in transformed]
    scale_factors = [sf for _, sf in transformed]
    mh = max(s[0] for s in image_shapes)
    mw = max(s[1] for s in image_shapes)
    bh = math.ceil(mh / stride) * stride
    bw = math.ceil(mw / stride) * stride
    batched = jnp.zeros((len(images), bh, bw, 3), jnp.float32)     # NHWC from the start
    for i, (im, _) in enumerate(transformed):
        batched = batched.at[i, :im.shape[0], :im.shape[1], :].set(im)
    return batched, image_shapes, scale_factors


# TODO(synk): darknet_pan_backbone source was not provided; this stand-in backbone preserves
# the contract (stride 8/16/32 pyramid with (128,256,512) channels for width_multiple=0.5)
# via space-to-depth + Pallas 1x1-conv + SiLU stages.
def backbone_forward(images_nhwc, params):
    x = images_nhwc.astype(jnp.bfloat16)
    x = space_to_depth(x, 8)                                       # (N, H/8, W/8, 192)
    c3 = conv1x1(x, params['w1'], params['b1'], act=True)                        # 128, stride 8
    c4 = conv1x1(space_to_depth(c3, 2), params['w2'], params['b2'], act=True)    # 256, stride 16
    c5 = conv1x1(space_to_depth(c4, 2), params['w3'], params['b3'], act=True)    # 512, stride 32
    return [c3, c4, c5]


def nms_numpy(boxes, scores, threshold):
    x1, y1, x2, y2 = boxes.T
    areas = (x2 - x1) * (y2 - y1)
    order = np.argsort(-scores, kind='stable')
    keep = []
    while order.size > 0:
        i = order[0]
        keep.append(i)
        rest = order[1:]
        xx1 = np.maximum(x1[i], x1[rest]); yy1 = np.maximum(y1[i], y1[rest])
        xx2 = np.minimum(x2[i], x2[rest]); yy2 = np.minimum(y2[i], y2[rest])
        inter = np.maximum(0.0, xx2 - xx1) * np.maximum(0.0, yy2 - yy1)
        iou = inter / (areas[i] + areas[rest] - inter + 1e-12)
        order = rest[iou <= threshold]
    return np.asarray(keep, dtype=np.int64)


def batched_nms_numpy(boxes, scores, labels, threshold, max_size):
    offsets = labels.astype(boxes.dtype) * max_size
    return nms_numpy(boxes + offsets[:, None], scores, threshold)


def head_inference(decoded, score_thresh, nms_thresh, detections,
                   image_shapes, scale_factors, max_size):
    ids_l, boxes_l, cls_l = [], [], []
    for obj, box, cls in decoded:
        obj_np, box_np, cls_np = np.asarray(obj), np.asarray(box), np.asarray(cls)
        # TODO(synk): dynamic-shape score filtering + greedy NMS have no Pallas/TPU
        # equivalent (data-dependent output sizes); done on host in NumPy.
        n, y, x, a = np.where(obj_np > score_thresh)
        ids_l.append(n)
        boxes_l.append(box_np[n, y, x, a])
        cls_l.append(cls_np[n, y, x, a])
    ids = np.concatenate(ids_l)
    boxes = np.concatenate(boxes_l)
    logits = np.concatenate(cls_l)
    indices, labels = np.where(logits > score_thresh)
    ids, boxes, scores = ids[indices], boxes[indices], logits[indices, labels]

    results = []
    for i, im_s in enumerate(image_shapes):
        keep = np.where(ids == i)[0]
        box, label, score = boxes[keep], labels[keep], scores[keep]
        if len(box) > 0:
            box[:, 0] = np.clip(box[:, 0], 0, im_s[1])
            box[:, 1] = np.clip(box[:, 1], 0, im_s[0])
            box[:, 2] = np.clip(box[:, 2], 0, im_s[1])
            box[:, 3] = np.clip(box[:, 3], 0, im_s[0])
            keep = batched_nms_numpy(box, score, label, nms_thresh, max_size)[:detections]
            box, label, score = box[keep] / scale_factors[i], label[keep], score[keep]
        results.append(dict(boxes=box, labels=label, scores=score))
    return results


# ---------------------------------------------------------------------------
# YOLOv5 (inference path)
# ---------------------------------------------------------------------------
class YOLOv5Pallas:
    COUT_PAD = 128   # lane-pad the predictor output channels (A*L=24 -> 128)

    def __init__(self, num_classes, img_sizes=(64, 64), score_thresh=0.001,
                 nms_thresh=0.6, detections=100):
        self.num_classes = num_classes
        self.L = num_classes + 5
        self.anchors = [np.array([[6.1, 8.1], [20.6, 12.6], [11.2, 23.7]], np.float32),
                        np.array([[36.2, 26.8], [25.9, 57.2], [57.8, 47.9]], np.float32),
                        np.array([[122.1, 78.3], [73.7, 143.8], [236.1, 213.1]], np.float32)]
        self.strides = (8, 16, 32)
        self.num_anchors = [3, 3, 3]
        self.score_thresh = score_thresh
        self.nms_thresh = nms_thresh
        self.detections = detections
        self.min_size, self.max_size = img_sizes
        self.pad_stride = max(self.strides)
        self.params = self._init_params(jax.random.PRNGKey(0))

    def _init_params(self, key):
        ks = jax.random.split(key, 8)
        p = {}
        # backbone weights in bf16 (f32 bias); contraction dims at natural width (no Cin pad).
        p['w1'] = (jax.random.normal(ks[0], (192, 128), jnp.float32) * 0.05).astype(jnp.bfloat16)
        p['b1'] = jnp.zeros((128,), jnp.float32)
        p['w2'] = (jax.random.normal(ks[1], (512, 256), jnp.float32) * 0.05).astype(jnp.bfloat16)
        p['b2'] = jnp.zeros((256,), jnp.float32)
        p['w3'] = (jax.random.normal(ks[2], (1024, 512), jnp.float32) * 0.05).astype(jnp.bfloat16)
        p['b3'] = jnp.zeros((512,), jnp.float32)
        in_ch = (128, 256, 512)
        pw, pb = [], []
        for i, (cin, n, s) in enumerate(zip(in_ch, self.num_anchors, self.strides)):
            cout = n * self.L
            w = jax.random.normal(ks[3 + i], (cin, cout), jnp.float32) * 0.01
            w = jnp.pad(w, ((0, 0), (0, self.COUT_PAD - cout))).astype(jnp.bfloat16)  # zero pad lanes
            b = np.zeros((n, self.L), np.float32)
            b[:, 4] += math.log(8 / (416 / s) ** 2)
            b[:, 5:] += math.log(0.6 / (self.num_classes - 0.99))
            b = np.concatenate([b.reshape(-1), np.zeros((self.COUT_PAD - cout,), np.float32)])
            pw.append(w)
            pb.append(jnp.asarray(b))
        p['pw'], p['pb'] = pw, pb
        return p

    def forward(self, images):
        batched, image_shapes, scale_factors = transformer_forward(
            images, self.min_size, self.max_size, self.pad_stride)
        feats = backbone_forward(batched, self.params)
        decoded = []
        for i, f in enumerate(feats):
            decoded.append(predict_decode_level(
                f, self.params['pw'][i], self.params['pb'][i], self.anchors[i],
                self.strides[i], self.num_classes, self.num_anchors[i]))
        max_size = max(int(batched.shape[1]), int(batched.shape[2]))
        results = head_inference(decoded, self.score_thresh, self.nms_thresh,
                                 self.detections, image_shapes, scale_factors, max_size)
        return results, decoded


if __name__ == "__main__":
    key = jax.random.PRNGKey(0)
    k1, k2 = jax.random.split(key)
    # two small variable-sized RGB images (C,H,W) as the module expects
    images = [jax.random.uniform(k1, (3, 50, 60), jnp.float32),
              jax.random.uniform(k2, (3, 64, 48), jnp.float32)]
    model = YOLOv5Pallas(num_classes=3, img_sizes=(64, 64), score_thresh=0.001)
    results, decoded = model.forward(images)
    jax.block_until_ready(decoded)
    assert len(results) == len(images)
    for r in results:
        assert set(r.keys()) == {"boxes", "labels", "scores"}
    print("KERNEL_OK")
</pallas_src>

<mosaic_0001>
module attributes {stable_mosaic.version = 11 : i64} {
  func.func @_matmul_bias_kernel(%arg0: i32, %arg1: memref<128x192xbf16, #tpu.memory_space<vmem>>, %arg2: memref<192x128xbf16, #tpu.memory_space<vmem>>, %arg3: memref<1x128xf32, #tpu.memory_space<vmem>>, %arg4: memref<128x128xbf16, #tpu.memory_space<vmem>>) attributes {dimension_semantics = [#tpu.dimension_semantics<parallel>], iteration_bounds = array<i64: 1>, scalar_prefetch = 0 : i64, scratch_operands = 0 : i64, tpu.core_type = #tpu.core_type<tc>, window_params = [{transform_indices = @transform_0, window_bounds = array<i64: 128, 192>}, {pipeline_mode = #tpu.pipeline_mode<synchronous>, transform_indices = @transform_1, window_bounds = array<i64: 192, 128>}, {pipeline_mode = #tpu.pipeline_mode<synchronous>, transform_indices = @transform_2, window_bounds = array<i64: 1, 128>}, {transform_indices = @transform_3, window_bounds = array<i64: 128, 128>}]} {
    %c0 = arith.constant 0 : index
    %c0_0 = arith.constant 0 : index
    %0 = vector.load %arg1[%c0, %c0_0] : memref<128x192xbf16, #tpu.memory_space<vmem>>, vector<128x192xbf16>
    %c0_1 = arith.constant 0 : index
    %c0_2 = arith.constant 0 : index
    %1 = vector.load %arg2[%c0_1, %c0_2] : memref<192x128xbf16, #tpu.memory_space<vmem>>, vector<192x128xbf16>
    %cst = arith.constant dense<0.000000e+00> : vector<128x128xf32>
    %2 = tpu.matmul %0, %1, %cst {dimension_numbers = #tpu.dot_dimension_numbers<[1], [0], [0], [1], [0, 0, 1, 1], [], []>} : vector<128x192xbf16>, vector<192x128xbf16>, vector<128x128xf32> -> vector<128x128xf32>
    %c0_3 = arith.constant 0 : index
    %c0_4 = arith.constant 0 : index
    %3 = vector.load %arg3[%c0_3, %c0_4] : memref<1x128xf32, #tpu.memory_space<vmem>>, vector<1x128xf32>
    %4 = vector.broadcast %3 : vector<1x128xf32> to vector<128x128xf32>
    %5 = arith.addf %2, %4 : vector<128x128xf32>
    %cst_5 = arith.constant 0.000000e+00 : f32
    %6 = vector.broadcast %cst_5 : f32 to vector<128x128xf32>
    %7 = arith.subf %6, %5 : vector<128x128xf32>
    %8 = math.exp %7 : vector<128x128xf32>
    %cst_6 = arith.constant 1.000000e+00 : f32
    %9 = vector.broadcast %cst_6 : f32 to vector<128x128xf32>
    %10 = arith.addf %9, %8 : vector<128x128xf32>
    %11 = tpu.reciprocal %10 {approx = true} : vector<128x128xf32> -> vector<128x128xf32>
    %12 = arith.mulf %5, %11 : vector<128x128xf32>
    %13 = arith.truncf %12 : vector<128x128xf32> to vector<128x128xbf16>
    %c0_7 = arith.constant 0 : index
    %c0_8 = arith.constant 0 : index
    %14 = vector.load %arg4[%c0_7, %c0_8] : memref<128x128xbf16, #tpu.memory_space<vmem>>, vector<128x128xbf16>
    tpu.vector_store %arg4[%c0_7, %c0_8], %13 {strides = array<i32>} : memref<128x128xbf16, #tpu.memory_space<vmem>>, vector<128x128xbf16>,
    return
  }
  func.func @transform_0(%arg0: i32) -> (i32, i32) {
    %c0_i32 = arith.constant 0 : i32
    %c0_i32_0 = arith.constant 0 : i32
    return %arg0, %c0_i32 : i32, i32
  }
  func.func @transform_1(%arg0: i32) -> (i32, i32) {
    %c0_i32 = arith.constant 0 : i32
    %c0_i32_0 = arith.constant 0 : i32
    %c0_i32_1 = arith.constant 0 : i32
    return %c0_i32, %c0_i32_0 : i32, i32
  }
  func.func @transform_2(%arg0: i32) -> (i32, i32) {
    %c0_i32 = arith.constant 0 : i32
    %c0_i32_0 = arith.constant 0 : i32
    %c0_i32_1 = arith.constant 0 : i32
    return %c0_i32, %c0_i32_0 : i32, i32
  }
  func.func @transform_3(%arg0: i32) -> (i32, i32) {
    %c0_i32 = arith.constant 0 : i32
    %c0_i32_0 = arith.constant 0 : i32
    return %arg0, %c0_i32 : i32, i32
  }
}

</mosaic_0001>

<llo_original>
// kernel: tpu_custom_call.1
$region0: #{tpu_custom_call.1}
  #allocation0 [shape = 'u32[]', space=smem, size = 0x4, offset = 0x4, fixed_abs, tag = 'smem constant byte address 0x4 - core index']
  #allocation1 [shape = 'u32[144,128]{1,0:T(1,128)}', space=vmem, size = 0x12000, scoped, tag = 'internal scratch']
  %s0 = inlined_call_operand.vmem [shape: bf16[128,192], index: 0, kind: input, shape index: {}]
  %s1 = inlined_call_operand.vmem [shape: bf16[192,128], index: 1, kind: input, shape index: {}]
  %s2 = inlined_call_operand.vmem [shape: f32[1,128], index: 2, kind: input, shape index: {}]
  %s3 = inlined_call_operand.hbm [shape: bf16[128,128], index: 3, kind: output, shape index: {}]
  %s4 = sld [smem:[#allocation0]]
  $region22: #{tpu_custom_call.1} parent=0
    _
  %s6 = ssub.s32 1, %s4
  %s7 = scalar_select 0, %s6, %s4
  $region1: #{tpu_custom_call.1} parent=0
    #allocation2 [shape = 'u8[32768]{0}', space=vmem, size = 0x8000, scoped, tag = 'output window, operand 0, single buffered']
    #allocation3 [shape = 's32[1]{0}', space=sflag, size = 0x4, scoped, tag = 'scoped memory for tpu_custom_call.1']
    %8 = vsyncpa [#allocation3], 0
    // Predicated region
    $region2: #{tpu_custom_call.1} parent=1 // pred_check
      _
    $region3: #{tpu_custom_call.1} parent=1 // pred_check_branch
      %10 = sbr.rel (0) target = $region5
    $region4: #{tpu_custom_call.1} parent=1 // pred_region
      _
    $region5: #{tpu_custom_call.1} parent=1 // pred_fallthru
      _
    // Predicated region
    $region6: #{tpu_custom_call.1} parent=1 // pred_check
      _
    $region7: #{tpu_custom_call.1} parent=1 // pred_check_branch
      %12 = sbr.rel (0) target = $region9
    $region8: #{tpu_custom_call.1} parent=1 // pred_region
      _
    $region9: #{tpu_custom_call.1} parent=1 // pred_fallthru
      _
    // Predicated region
    $region10: #{tpu_custom_call.1} parent=1 // pred_check
      _
    $region11: #{tpu_custom_call.1} parent=1 // pred_check_branch
      %14 = sbr.rel (0) target = $region13
    $region12: #{tpu_custom_call.1} parent=1 // pred_region
      _
    $region13: #{tpu_custom_call.1} parent=1 // pred_fallthru
      _
    %v16 = vld [vmem:[%s0] sm:$0xff]
    %v17 = vld [vmem:[%s0 + $0x8] sm:$0xff]
    %v18 = vld [vmem:[%s0 + $0x10] sm:$0xff]
    %v19 = vld [vmem:[%s0 + $0x18] sm:$0xff]
    %v20 = vld [vmem:[%s0 + $0x20] sm:$0xff]
    %v21 = vld [vmem:[%s0 + $0x28] sm:$0xff]
    %v22 = vld [vmem:[%s0 + $0x30] sm:$0xff]
    %v23 = vld [vmem:[%s0 + $0x38] sm:$0xff]
    %v24 = vld [vmem:[%s0 + $0x40] sm:$0xff]
    %v25 = vld [vmem:[%s0 + $0x48] sm:$0xff]
    %v26 = vld [vmem:[%s0 + $0x50] sm:$0xff]
    %v27 = vld [vmem:[%s0 + $0x58] sm:$0xff]
    %v28 = vld [vmem:[%s0 + $0x60] sm:$0xff]
    %v29 = vld [vmem:[%s0 + $0x68] sm:$0xff]
    %v30 = vld [vmem:[%s0 + $0x70] sm:$0xff]
    %v31 = vld [vmem:[%s0 + $0x78] sm:$0xff]
    %v32 = vld [vmem:[%s1] sm:$0xf]
    %v33 = vld [vmem:[%s1 + $0x4] sm:$0xf]
    %v34 = vld [vmem:[%s1 + $0x8] sm:$0xf]
    %v35 = vld [vmem:[%s1 + $0xc] sm:$0xf]
    %v36 = vld [vmem:[%s1 + $0x10] sm:$0xf]
    %v37 = vld [vmem:[%s1 + $0x14] sm:$0xf]
    %v38 = vld [vmem:[%s1 + $0x18] sm:$0xf]
    %v39 = vld [vmem:[%s1 + $0x1c] sm:$0xf]
    %v40 = vld [vmem:[%s1 + $0x20] sm:$0xf]
    %v41 = vld [vmem:[%s1 + $0x24] sm:$0xf]
    %v42 = vld [vmem:[%s1 + $0x28] sm:$0xf]
    %v43 = vld [vmem:[%s1 + $0x2c] sm:$0xf]
    %v44 = vld [vmem:[%s1 + $0x30] sm:$0xf]
    %v45 = vld [vmem:[%s1 + $0x34] sm:$0xf]
    %v46 = vld [vmem:[%s1 + $0x38] sm:$0xf]
    %v47 = vld [vmem:[%s1 + $0x3c] sm:$0xf]
    %v48 = vld [vmem:[%s1 + $0x40] sm:$0xf]
    %v49 = vld [vmem:[%s1 + $0x44] sm:$0xf]
    %v50 = vld [vmem:[%s1 + $0x48] sm:$0xf]
    %v51 = vld [vmem:[%s1 + $0x4c] sm:$0xf]
    %v52 = vld [vmem:[%s1 + $0x50] sm:$0xf]
    %v53 = vld [vmem:[%s1 + $0x54] sm:$0xf]
    %v54 = vld [vmem:[%s1 + $0x58] sm:$0xf]
    %v55 = vld [vmem:[%s1 + $0x5c] sm:$0xf]
    %v56 = vld [vmem:[%s2] sm:$0x1]
    %v58 = vlaneseq
    %v59 = vshrl.u32 %v58, 7
    %v60 = vsub.s32 0, %v59
    %v61 = vrot.slane %v56, %v60
    %v79 = vunpack.c.l.b16 %v16
    %v80 = vunpack.c.h.b16 %v16
    %v81 = vunpack.c.l.b16 %v17
    %v82 = vunpack.c.h.b16 %v17
    %v83 = vunpack.c.l.b16 %v18
    %v84 = vunpack.c.h.b16 %v18
    %v85 = vunpack.c.l.b16 %v19
    %v86 = vunpack.c.h.b16 %v19
    %v87 = vunpack.c.l.b16 %v20
    %v88 = vunpack.c.h.b16 %v20
    %v89 = vunpack.c.l.b16 %v21
    %v90 = vunpack.c.h.b16 %v21
    %v91 = vunpack.c.l.b16 %v22
    %v92 = vunpack.c.h.b16 %v22
    %v93 = vunpack.c.l.b16 %v23
    %v94 = vunpack.c.h.b16 %v23
    %v95 = vunpack.c.l.b16 %v24
    %v96 = vunpack.c.h.b16 %v24
    %v97 = vunpack.c.l.b16 %v25
    %v98 = vunpack.c.h.b16 %v25
    %v99 = vunpack.c.l.b16 %v26
    %v100 = vunpack.c.h.b16 %v26
    %v101 = vunpack.c.l.b16 %v27
    %v102 = vunpack.c.h.b16 %v27
    %v103 = vunpack.c.l.b16 %v28
    %v104 = vunpack.c.h.b16 %v28
    %v105 = vunpack.c.l.b16 %v29
    %v106 = vunpack.c.h.b16 %v29
    %v107 = vunpack.c.l.b16 %v30
    %v108 = vunpack.c.h.b16 %v30
    %v109 = vunpack.c.l.b16 %v31
    %v110 = vunpack.c.h.b16 %v31
    %v111 = vpack.c.b16 %v81, %v79
    %v112 = vpack.c.b16 %v82, %v80
    %v113 = vpack.c.b16 %v85, %v83
    %v114 = vpack.c.b16 %v86, %v84
    %v115 = vpack.c.b16 %v89, %v87
    %v116 = vpack.c.b16 %v90, %v88
    %v117 = vpack.c.b16 %v93, %v91
    %v118 = vpack.c.b16 %v94, %v92
    %v119 = vpack.c.b16 %v97, %v95
    %v120 = vpack.c.b16 %v98, %v96
    %v121 = vpack.c.b16 %v101, %v99
    %v122 = vpack.c.b16 %v102, %v100
    %v123 = vpack.c.b16 %v105, %v103
    %v124 = vpack.c.b16 %v106, %v104
    %v125 = vpack.c.b16 %v109, %v107
    %v126 = vpack.c.b16 %v110, %v108
    %v159 = vunpack.c.l.b16 %v32
    %v160 = vunpack.c.l.b16 %v33
    %v161 = vunpack.c.l.b16 %v34
    %v162 = vunpack.c.l.b16 %v35
    %v163 = vunpack.c.l.b16 %v36
    %v164 = vunpack.c.l.b16 %v37
    %v165 = vunpack.c.l.b16 %v38
    %v166 = vunpack.c.l.b16 %v39
    %v167 = vunpack.c.l.b16 %v40
    %v168 = vunpack.c.l.b16 %v41
    %v169 = vunpack.c.l.b16 %v42
    %v170 = vunpack.c.l.b16 %v43
    %v171 = vunpack.c.l.b16 %v44
    %v172 = vunpack.c.l.b16 %v45
    %v173 = vunpack.c.l.b16 %v46
    %v174 = vunpack.c.l.b16 %v47
    %v175 = vunpack.c.l.b16 %v48
    %v176 = vunpack.c.l.b16 %v49
    %v177 = vunpack.c.l.b16 %v50
    %v178 = vunpack.c.l.b16 %v51
    %v179 = vunpack.c.l.b16 %v52
    %v180 = vunpack.c.l.b16 %v53
    %v181 = vunpack.c.l.b16 %v54
    %v182 = vunpack.c.l.b16 %v55
    %v183 = vpack.c.b16 %v160, %v159
    %v184 = vpack.c.b16 %v162, %v161
    %v185 = vpack.c.b16 %v164, %v163
    %v186 = vpack.c.b16 %v166, %v165
    %v187 = vpack.c.b16 %v168, %v167
    %v188 = vpack.c.b16 %v170, %v169
    %v189 = vpack.c.b16 %v172, %v171
    %v190 = vpack.c.b16 %v174, %v173
    %v191 = vpack.c.b16 %v176, %v175
    %v192 = vpack.c.b16 %v178, %v177
    %v193 = vpack.c.b16 %v180, %v179
    %v194 = vpack.c.b16 %v182, %v181
    %vm207 = vcmask 523264
    %v209 = vsel %vm207, %v112, 0
    %v212 = vsel %vm207, %v114, 0
    %v215 = vsel %vm207, %v116, 0
    %v218 = vsel %vm207, %v118, 0
    %v221 = vsel %vm207, %v120, 0
    %v224 = vsel %vm207, %v122, 0
    %v227 = vsel %vm207, %v124, 0
    %v230 = vsel %vm207, %v126, 0
    %232 = vmatprep.subr.bf16.mxu0 0
    %233 = vmatpush1.bf16.msra.mxu0 %v183
    %234 = vmatprep.subr.bf16.mxu0 0
    %235 = vmatpush1.bf16.msra.mxu0 %v184
    %236 = vmatprep.subr.bf16.mxu0 0
    %237 = vmatpush1.bf16.msra.mxu0 %v185
    %238 = vmatprep.subr.bf16.mxu0 0
    %239 = vmatpush1.bf16.msra.mxu0 %v186
    %240 = vmatprep.subr.bf16.mxu0 0
    %241 = vmatpush1.bf16.msra.mxu0 %v187
    %242 = vmatprep.subr.bf16.mxu0 0
    %243 = vmatpush1.bf16.msra.mxu0 %v188
    %244 = vmatprep.subr.bf16.mxu0 0
    %245 = vmatpush1.bf16.msra.mxu0 %v189
    %246 = vmatprep.subr.bf16.mxu0 0
    %247 = vmatpush1.bf16.msra.mxu0 %v190
    %248 = vmatprep.subr.bf16.mxu0 0
    %249 = vmatpush1.bf16.msra.mxu0 %v191
    %250 = vmatprep.subr.bf16.mxu0 0
    %251 = vmatpush1.bf16.msra.mxu0 %v192
    %252 = vmatprep.subr.bf16.mxu0 0
    %253 = vmatpush1.bf16.msra.mxu0 %v193
    %254 = vmatprep.subr.bf16.mxu0 0
    %255 = vmatpush1.bf16.msra.mxu0 %v194
    %256 = vmatprep.subr.bf16.mxu0 0
    %257 = vmatpush1.bf16.msra.mxu0 0
    %258 = vmatprep.subr.bf16.mxu0 0
    %259 = vmatpush1.bf16.msra.mxu0 0
    %260 = vmatprep.subr.bf16.mxu0 0
    %261 = vmatpush1.bf16.msra.mxu0 0
    %262 = vmatprep.subr.bf16.mxu0 0
    %263 = vmatpush1.bf16.msra.mxu0 0
    %264 = vmatprep.mubr.bf16.mxu0 %v209
    %265 = vmatmul.mubr.bf16.gmra.mrb[0].mxu0 %v111
    %v266 = vpop.f32.mrb[0].mxu0
    %v267 = vadd.f32 %v61, %v266
    %v268 = vpop.f32.mrb[0].mxu0
    %v269 = vpop.f32.mrb[0].mxu0
    %v270 = vadd.f32 %v61, %v269
    %v271 = vpop.f32.mrb[0].mxu0
    %272 = vmatprep.mubr.bf16.mxu0 %v212
    %273 = vmatmul.mubr.bf16.gmra.mrb[0].mxu0 %v113
    %v274 = vpop.f32.mrb[0].mxu0
    %v275 = vadd.f32 %v61, %v274
    %v276 = vpop.f32.mrb[0].mxu0
    %v277 = vpop.f32.mrb[0].mxu0
    %v278 = vadd.f32 %v61, %v277
    %v279 = vpop.f32.mrb[0].mxu0
    %280 = vmatprep.mubr.bf16.mxu0 %v215
    %281 = vmatmul.mubr.bf16.gmra.mrb[0].mxu0 %v115
    %v282 = vpop.f32.mrb[0].mxu0
    %v283 = vadd.f32 %v61, %v282
    %v284 = vpop.f32.mrb[0].mxu0
    %v285 = vpop.f32.mrb[0].mxu0
    %v286 = vadd.f32 %v61, %v285
    %v287 = vpop.f32.mrb[0].mxu0
    %288 = vmatprep.mubr.bf16.mxu0 %v218
    %289 = vmatmul.mubr.bf16.gmra.mrb[0].mxu0 %v117
    %v290 = vpop.f32.mrb[0].mxu0
    %v291 = vadd.f32 %v61, %v290
    %v292 = vpop.f32.mrb[0].mxu0
    %v293 = vpop.f32.mrb[0].mxu0
    %v294 = vadd.f32 %v61, %v293
    %v295 = vpop.f32.mrb[0].mxu0
    %296 = vmatprep.mubr.bf16.mxu0 %v221
    %297 = vmatmul.mubr.bf16.gmra.mrb[0].mxu0 %v119
    %v298 = vpop.f32.mrb[0].mxu0
    %v299 = vadd.f32 %v61, %v298
    %v300 = vpop.f32.mrb[0].mxu0
    %v301 = vpop.f32.mrb[0].mxu0
    %v302 = vadd.f32 %v61, %v301
    %v303 = vpop.f32.mrb[0].mxu0
    %304 = vmatprep.mubr.bf16.mxu0 %v224
    %305 = vmatmul.mubr.bf16.gmra.mrb[0].mxu0 %v121
    %v306 = vpop.f32.mrb[0].mxu0
    %v307 = vadd.f32 %v61, %v306
    %v308 = vpop.f32.mrb[0].mxu0
    %v309 = vpop.f32.mrb[0].mxu0
    %v310 = vadd.f32 %v61, %v309
    %v311 = vpop.f32.mrb[0].mxu0
    %312 = vmatprep.mubr.bf16.mxu0 %v227
    %313 = vmatmul.mubr.bf16.gmra.mrb[0].mxu0 %v123
    %v314 = vpop.f32.mrb[0].mxu0
    %v315 = vadd.f32 %v61, %v314
    %v316 = vpop.f32.mrb[0].mxu0
    %v317 = vpop.f32.mrb[0].mxu0
    %v318 = vadd.f32 %v61, %v317
    %v319 = vpop.f32.mrb[0].mxu0
    %320 = vmatprep.mubr.bf16.mxu0 %v230
    %321 = vmatmul.mubr.bf16.gmra.mrb[0].mxu0 %v125
    %v322 = vpop.f32.mrb[0].mxu0
    %v323 = vadd.f32 %v61, %v322
    %v324 = vpop.f32.mrb[0].mxu0
    %v325 = vpop.f32.mrb[0].mxu0
    %v326 = vadd.f32 %v61, %v325
    %v327 = vpop.f32.mrb[0].mxu0
    %328 = vdwg.mxu0
    %v329 = vsub.f32 0.0, %v267
    %v330 = vsub.f32 0.0, %v270
    %v331 = vsub.f32 0.0, %v275
    %v332 = vsub.f32 0.0, %v278
    %v333 = vsub.f32 0.0, %v283
    %v334 = vsub.f32 0.0, %v286
    %v335 = vsub.f32 0.0, %v291
    %v336 = vsub.f32 0.0, %v294
    %v337 = vsub.f32 0.0, %v299
    %v338 = vsub.f32 0.0, %v302
    %v339 = vsub.f32 0.0, %v307
    %v340 = vsub.f32 0.0, %v310
    %v341 = vsub.f32 0.0, %v315
    %v342 = vsub.f32 0.0, %v318
    %v343 = vsub.f32 0.0, %v323
    %v344 = vsub.f32 0.0, %v326
    %v345 = vmul.f32 %v329, 1.442695
    %v346 = vpow.pop %v345
    %v347 = vmul.f32 %v330, 1.442695
    %v348 = vpow.pop %v347
    %v349 = vmul.f32 %v331, 1.442695
    %v350 = vpow.pop %v349
    %v351 = vmul.f32 %v332, 1.442695
    %v352 = vpow.pop %v351
    %v353 = vmul.f32 %v333, 1.442695
    %v354 = vpow.pop %v353
    %v355 = vmul.f32 %v334, 1.442695
    %v356 = vpow.pop %v355
    %v357 = vmul.f32 %v335, 1.442695
    %v358 = vpow.pop %v357
    %v359 = vmul.f32 %v336, 1.442695
    %v360 = vpow.pop %v359
    %v361 = vmul.f32 %v337, 1.442695
    %v362 = vpow.pop %v361
    %v363 = vmul.f32 %v338, 1.442695
    %v364 = vpow.pop %v363
    %v365 = vmul.f32 %v339, 1.442695
    %v366 = vpow.pop %v365
    %v367 = vmul.f32 %v340, 1.442695
    %v368 = vpow.pop %v367
    %v369 = vmul.f32 %v341, 1.442695
    %v370 = vpow.pop %v369
    %v371 = vmul.f32 %v342, 1.442695
    %v372 = vpow.pop %v371
    %v373 = vmul.f32 %v343, 1.442695
    %v374 = vpow.pop %v373
    %v375 = vmul.f32 %v344, 1.442695
    %v376 = vpow.pop %v375
    %v377 = vadd.f32 %v346, 1.0
    %v378 = vadd.f32 %v348, 1.0
    %v379 = vadd.f32 %v350, 1.0
    %v380 = vadd.f32 %v352, 1.0
    %v381 = vadd.f32 %v354, 1.0
    %v382 = vadd.f32 %v356, 1.0
    %v383 = vadd.f32 %v358, 1.0
    %v384 = vadd.f32 %v360, 1.0
    %v385 = vadd.f32 %v362, 1.0
    %v386 = vadd.f32 %v364, 1.0
    %v387 = vadd.f32 %v366, 1.0
    %v388 = vadd.f32 %v368, 1.0
    %v389 = vadd.f32 %v370, 1.0
    %v390 = vadd.f32 %v372, 1.0
    %v391 = vadd.f32 %v374, 1.0
    %v392 = vadd.f32 %v376, 1.0
    %v393 = vrcp.pop %v377
    %v394 = vrcp.pop %v378
    %v395 = vrcp.pop %v379
    %v396 = vrcp.pop %v380
    %v397 = vrcp.pop %v381
    %v398 = vrcp.pop %v382
    %v399 = vrcp.pop %v383
    %v400 = vrcp.pop %v384
    %v401 = vrcp.pop %v385
    %v402 = vrcp.pop %v386
    %v403 = vrcp.pop %v387
    %v404 = vrcp.pop %v388
    %v405 = vrcp.pop %v389
    %v406 = vrcp.pop %v390
    %v407 = vrcp.pop %v391
    %v408 = vrcp.pop %v392
    %v409 = vmul.f32 %v267, %v393
    %v410 = vmul.f32 %v270, %v394
    %v411 = vmul.f32 %v275, %v395
    %v412 = vmul.f32 %v278, %v396
    %v413 = vmul.f32 %v283, %v397
    %v414 = vmul.f32 %v286, %v398
    %v415 = vmul.f32 %v291, %v399
    %v416 = vmul.f32 %v294, %v400
    %v417 = vmul.f32 %v299, %v401
    %v418 = vmul.f32 %v302, %v402
    %v419 = vmul.f32 %v307, %v403
    %v420 = vmul.f32 %v310, %v404
    %v421 = vmul.f32 %v315, %v405
    %v422 = vmul.f32 %v318, %v406
    %v423 = vmul.f32 %v323, %v407
    %v424 = vmul.f32 %v326, %v408
    %v425 = vpack.c.bf16 %v410, %v409
    %v426 = vpack.c.bf16 %v412, %v411
    %v427 = vpack.c.bf16 %v414, %v413
    %v428 = vpack.c.bf16 %v416, %v415
    %v429 = vpack.c.bf16 %v418, %v417
    %v430 = vpack.c.bf16 %v420, %v419
    %v431 = vpack.c.bf16 %v422, %v421
    %v432 = vpack.c.bf16 %v424, %v423
    %v441 = vunpack.c.l.b16 %v425
    %v442 = vunpack.c.h.b16 %v425
    %v443 = vunpack.c.l.b16 %v426
    %v444 = vunpack.c.h.b16 %v426
    %v445 = vunpack.c.l.b16 %v427
    %v446 = vunpack.c.h.b16 %v427
    %v447 = vunpack.c.l.b16 %v428
    %v448 = vunpack.c.h.b16 %v428
    %v449 = vunpack.c.l.b16 %v429
    %v450 = vunpack.c.h.b16 %v429
    %v451 = vunpack.c.l.b16 %v430
    %v452 = vunpack.c.h.b16 %v430
    %v453 = vunpack.c.l.b16 %v431
    %v454 = vunpack.c.h.b16 %v431
    %v455 = vunpack.c.l.b16 %v432
    %v456 = vunpack.c.h.b16 %v432
    %v457 = vpack.c.b16 %v441, %v441
    %v458 = vpack.c.b16 %v442, %v442
    %v459 = vpack.c.b16 %v443, %v443
    %v460 = vpack.c.b16 %v444, %v444
    %v461 = vpack.c.b16 %v445, %v445
    %v462 = vpack.c.b16 %v446, %v446
    %v463 = vpack.c.b16 %v447, %v447
    %v464 = vpack.c.b16 %v448, %v448
    %v465 = vpack.c.b16 %v449, %v449
    %v466 = vpack.c.b16 %v450, %v450
    %v467 = vpack.c.b16 %v451, %v451
    %v468 = vpack.c.b16 %v452, %v452
    %v469 = vpack.c.b16 %v453, %v453
    %v470 = vpack.c.b16 %v454, %v454
    %v471 = vpack.c.b16 %v455, %v455
    %v472 = vpack.c.b16 %v456, %v456
    %489 = vst [vmem:[#allocation2] sm:$0xf] %v457
    %490 = vst [vmem:[#allocation2 + $0x4] sm:$0xf] %v458
    %491 = vst [vmem:[#allocation2 + $0x8] sm:$0xf] %v459
    %492 = vst [vmem:[#allocation2 + $0xc] sm:$0xf] %v460
    %493 = vst [vmem:[#allocation2 + $0x10] sm:$0xf] %v461
    %494 = vst [vmem:[#allocation2 + $0x14] sm:$0xf] %v462
    %495 = vst [vmem:[#allocation2 + $0x18] sm:$0xf] %v463
    %496 = vst [vmem:[#allocation2 + $0x1c] sm:$0xf] %v464
    %497 = vst [vmem:[#allocation2 + $0x20] sm:$0xf] %v465
    %498 = vst [vmem:[#allocation2 + $0x24] sm:$0xf] %v466
    %499 = vst [vmem:[#allocation2 + $0x28] sm:$0xf] %v467
    %500 = vst [vmem:[#allocation2 + $0x2c] sm:$0xf] %v468
    %501 = vst [vmem:[#allocation2 + $0x30] sm:$0xf] %v469
    %502 = vst [vmem:[#allocation2 + $0x34] sm:$0xf] %v470
    %503 = vst [vmem:[#allocation2 + $0x38] sm:$0xf] %v471
    %504 = vst [vmem:[#allocation2 + $0x3c] sm:$0xf] %v472
    // Predicated region
    $region14: #{tpu_custom_call.1} parent=1 // pred_check
      _
    $region15: #{tpu_custom_call.1} parent=1 // pred_check_branch
      %506 = sbr.rel (0) target = $region17
    $region16: #{tpu_custom_call.1} parent=1 // pred_region
      %s508 = ssub.s32 1024, 1024
      %509 = vsyncadd [#allocation3], %s508
      %s510 = sshll.u32 [#allocation2], 4
      %s511 = int_to_ptr.vmem [resolvable:$true] %s510
      %516 = dma.vmem_to_hbm [thread:$0]  %s511, 1024, %s3, [#allocation3], 64, 64, 4
    $region17: #{tpu_custom_call.1} parent=1 // pred_fallthru
      _
    // Predicated region
    $region18: #{tpu_custom_call.1} parent=1 // pred_check
      _
    $region19: #{tpu_custom_call.1} parent=1 // pred_check_branch
      %518 = sbr.rel (0) target = $region21
    $region20: #{tpu_custom_call.1} parent=1 // pred_region
      %519 = dma.done [#allocation3], 1024
    $region21: #{tpu_custom_call.1} parent=1 // pred_fallthru
      _
    %520 = vsyncpa [#allocation3], 1

</llo_original>
